<compile_context>
chip_gen: v5e
topology: v5e:2x2
jax: 0.10.0
libtpu: 0.0.40
codegen_flags: <defaults>
</compile_context>

<pallas_src>
import numpy as np
import jax
import jax.numpy as jnp
from jax import lax
from jax.experimental import pallas as pl
from jax.experimental.pallas import tpu as pltpu

EPS = 1e-5  # InstanceNorm2d default eps


def _bilinear_matrix(in_size, scale):
    """Row-stochastic (out_size, in_size) matrix matching torch Upsample(bilinear,
    align_corners=False)."""
    out_size = in_size * scale
    U = np.zeros((out_size, in_size), dtype=np.float32)
    for d in range(out_size):
        src = max((d + 0.5) / scale - 0.5, 0.0)
        i0 = min(int(np.floor(src)), in_size - 1)
        i1 = min(i0 + 1, in_size - 1)
        lam = src - i0
        U[d, i0] += 1.0 - lam
        U[d, i1] += lam
    return U


def _pick_block_batch(N, max_b=8):
    """Images folded per grid step. Keep >= 2 grid steps so both v7x TensorCores get work."""
    return max(1, min(max_b, N // 2)) if N >= 2 else 1


def segnet_forward(x_nchw, weight, bias=None, scale=4):
    # Conv bias is exactly cancelled by InstanceNorm2d(affine=False)'s per-channel mean
    # subtraction, so it never reaches the kernel (dead compute).
    del bias

    N, Cin, H, W = x_nchw.shape
    Cout = weight.shape[0]
    Hout, Wout = H * scale, W * scale
    HW, HWout = H * W, Hout * Wout

    # NCHW -> (N, Cin, H*W): pure reshape, channels stay on sublanes, spatial on lanes.
    x_flat = x_nchw.reshape(N, Cin, HW)
    wmat = weight.reshape(Cout, Cin)                                     # (Cout, Cin)

    # Dense upsample operator: out_flat = yn_flat @ U, U = kron(Uh, Uw).T  -> (HW, HWout).
    # At H=W=8 this is 64x1024 f32 (256 KB) and replaces the separable relayout entirely.
    # TODO(synk): for much larger feature maps (H=W>=32) switch back to the separable
    # (Uh, Uw) path -- the dense kron grows as (H*W)^2*scale^2 and would blow VMEM on v7x.
    u_np = np.kron(_bilinear_matrix(H, scale), _bilinear_matrix(W, scale)).T
    u_mat = jnp.asarray(u_np, dtype=jnp.float32)                         # (HW, HWout)

    # Fold B images per grid step; pad N so the grid divides evenly (zero images are
    # harmless: yn = 0 * rsqrt(eps) = 0).
    B = _pick_block_batch(N)
    N_pad = ((N + B - 1) // B) * B
    if N_pad != N:
        x_flat = jnp.concatenate(
            [x_flat, jnp.zeros((N_pad - N, Cin, HW), dtype=x_flat.dtype)], axis=0)

    def kernel(x_ref, w_ref, u_ref, o_ref):
        w = w_ref[...]                                                   # (Cout, Cin)
        u = u_ref[...]                                                   # (HW, HWout)
        for b in range(B):                   # small static unroll (B <= 8)
            x = x_ref[b]                                                 # (Cin, HW)

            # 1x1 conv == channel matmul (bias dropped; cancelled by the norm below).
            y = jnp.dot(w, x, preferred_element_type=jnp.float32)        # (Cout, HW)

            # InstanceNorm2d (affine=False, biased variance) over the spatial (lane) axis.
            mean = jnp.mean(y, axis=-1, keepdims=True)                   # (Cout, 1)
            var = jnp.mean((y - mean) ** 2, axis=-1, keepdims=True)      # (Cout, 1)
            yn = (y - mean) * lax.rsqrt(var + EPS)                       # (Cout, HW)

            # Bilinear x4 upsample as one dense MXU matmul; single lane-dense store.
            o_ref[b] = jnp.dot(yn, u,
                               preferred_element_type=jnp.float32).astype(o_ref.dtype)

    cost = pl.CostEstimate(
        flops=2 * N_pad * (Cout * Cin * HW + Cout * HW * HWout),
        transcendentals=N_pad * Cout,
        bytes_accessed=N_pad * (Cin * HW * 4 + Cout * HWout * 4)
        + Cout * Cin * 4 + HW * HWout * 4,
    )

    out_flat = pl.pallas_call(
        kernel,
        out_shape=jax.ShapeDtypeStruct((N_pad, Cout, HWout), x_nchw.dtype),
        grid_spec=pltpu.PrefetchScalarGridSpec(
            num_scalar_prefetch=0,
            grid=(N_pad // B,),
            in_specs=[
                pl.BlockSpec((B, Cin, HW), lambda n: (n, 0, 0)),
                pl.BlockSpec((Cout, Cin), lambda n: (0, 0)),
                pl.BlockSpec((HW, HWout), lambda n: (0, 0)),
            ],
            out_specs=pl.BlockSpec((B, Cout, HWout), lambda n: (n, 0, 0)),
        ),
        compiler_params=pltpu.CompilerParams(
            # "parallel" lets the runtime shard the batch axis across v7x's two TCs.
            dimension_semantics=("parallel",)),
        cost_estimate=cost,
    )(x_flat, wmat, u_mat)

    # Lane-dense kernel output -> NCHW: row-major reshape, free in the wrapper.
    return out_flat[:N].reshape(N, Cout, Hout, Wout)


def segnet_reference(x_nchw, weight, bias, scale=4):
    """Pure-JAX reference (conv + bias, InstanceNorm, dense-kron bilinear upsample)."""
    N, Cin, H, W = x_nchw.shape
    Cout = weight.shape[0]
    w = weight.reshape(Cout, Cin)
    y = jnp.einsum('oc,nchw->nohw', w, x_nchw) + bias.reshape(1, Cout, 1, 1)
    mean = y.mean(axis=(2, 3), keepdims=True)
    var = y.var(axis=(2, 3), keepdims=True)               # biased, like InstanceNorm2d
    yn = (y - mean) / jnp.sqrt(var + EPS)
    U = jnp.asarray(np.kron(_bilinear_matrix(H, scale), _bilinear_matrix(W, scale)))
    out = jnp.einsum('pq,ncq->ncp', U, yn.reshape(N, Cout, H * W))
    return out.reshape(N, Cout, H * scale, W * scale)


if __name__ == "__main__":
    key = jax.random.PRNGKey(0)
    k1, k2, k3 = jax.random.split(key, 3)

    N, Cin, H, W = 2, 256, 8, 8      # Cin = 256 is fixed by the module
    num_classes = 2

    x = jax.random.normal(k1, (N, Cin, H, W), dtype=jnp.float32)

    # Deterministic Conv2d(256, num_classes, kernel_size=1) parameters
    bound = 1.0 / np.sqrt(Cin)
    weight = jax.random.uniform(k2, (num_classes, Cin, 1, 1),
                                minval=-bound, maxval=bound, dtype=jnp.float32)
    bias = jax.random.uniform(k3, (num_classes,),
                              minval=-bound, maxval=bound, dtype=jnp.float32)

    out = jax.block_until_ready(segnet_forward(x, weight, bias))
    assert out.shape == (N, num_classes, H * 4, W * 4)
    assert out.dtype == jnp.float32

    ref = jax.block_until_ready(segnet_reference(x, weight, bias))
    max_err = float(jnp.max(jnp.abs(out - ref)))
    assert max_err < 1e-3, f"mismatch vs reference: {max_err}"

    print("KERNEL_OK")
</pallas_src>

<mosaic_0001>
module attributes {stable_mosaic.version = 11 : i64} {
  func.func @kernel(%arg0: i32, %arg1: memref<1x256x64xf32, #tpu.memory_space<vmem>>, %arg2: memref<2x256xf32, #tpu.memory_space<vmem>>, %arg3: memref<64x1024xf32, #tpu.memory_space<vmem>>, %arg4: memref<1x2x1024xf32, #tpu.memory_space<vmem>>) attributes {dimension_semantics = [#tpu.dimension_semantics<parallel>], iteration_bounds = array<i64: 2>, scalar_prefetch = 0 : i64, scratch_operands = 0 : i64, tpu.core_type = #tpu.core_type<tc>, window_params = [{transform_indices = @transform_0, window_bounds = array<i64: 1, 256, 64>}, {pipeline_mode = #tpu.pipeline_mode<synchronous>, transform_indices = @transform_1, window_bounds = array<i64: 2, 256>}, {pipeline_mode = #tpu.pipeline_mode<synchronous>, transform_indices = @transform_2, window_bounds = array<i64: 64, 1024>}, {transform_indices = @transform_3, window_bounds = array<i64: 1, 2, 1024>}]} {
    %c0 = arith.constant 0 : index
    %c0_0 = arith.constant 0 : index
    %0 = vector.load %arg2[%c0, %c0_0] : memref<2x256xf32, #tpu.memory_space<vmem>>, vector<2x256xf32>
    %c0_1 = arith.constant 0 : index
    %c0_2 = arith.constant 0 : index
    %1 = vector.load %arg3[%c0_1, %c0_2] : memref<64x1024xf32, #tpu.memory_space<vmem>>, vector<64x1024xf32>
    %c0_3 = arith.constant 0 : index
    %c0_4 = arith.constant 0 : index
    %c0_5 = arith.constant 0 : index
    %2 = vector.load %arg1[%c0_3, %c0_4, %c0_5] : memref<1x256x64xf32, #tpu.memory_space<vmem>>, vector<1x256x64xf32>
    %3 = vector.shape_cast %2 : vector<1x256x64xf32> to vector<256x64xf32>
    %cst = arith.constant dense<0.000000e+00> : vector<2x64xf32>
    %4 = tpu.matmul %0, %3, %cst {dimension_numbers = #tpu.dot_dimension_numbers<[1], [0], [0], [1], [0, 0, 1, 1], [], []>} : vector<2x256xf32>, vector<256x64xf32>, vector<2x64xf32> -> vector<2x64xf32>
    %cst_6 = arith.constant dense<0.000000e+00> : vector<2xf32>
    %5 = vector.multi_reduction <add>, %4, %cst_6 [1] : vector<2x64xf32> to vector<2xf32>
    %6 = vector.shape_cast %5 : vector<2xf32> to vector<2x1xf32>
    %cst_7 = arith.constant 6.400000e+01 : f32
    %7 = vector.broadcast %cst_7 : f32 to vector<2x1xf32>
    %8 = arith.divf %6, %7 : vector<2x1xf32>
    %9 = vector.broadcast %8 : vector<2x1xf32> to vector<2x64xf32>
    %10 = arith.subf %4, %9 : vector<2x64xf32>
    %11 = arith.mulf %10, %10 : vector<2x64xf32>
    %cst_8 = arith.constant dense<0.000000e+00> : vector<2xf32>
    %12 = vector.multi_reduction <add>, %11, %cst_8 [1] : vector<2x64xf32> to vector<2xf32>
    %13 = vector.shape_cast %12 : vector<2xf32> to vector<2x1xf32>
    %cst_9 = arith.constant 6.400000e+01 : f32
    %14 = vector.broadcast %cst_9 : f32 to vector<2x1xf32>
    %15 = arith.divf %13, %14 : vector<2x1xf32>
    %16 = vector.broadcast %8 : vector<2x1xf32> to vector<2x64xf32>
    %17 = arith.subf %4, %16 : vector<2x64xf32>
    %cst_10 = arith.constant 9.99999974E-6 : f32
    %18 = vector.broadcast %cst_10 : f32 to vector<2x1xf32>
    %19 = arith.addf %15, %18 : vector<2x1xf32>
    %20 = math.rsqrt %19 : vector<2x1xf32>
    %21 = vector.broadcast %20 : vector<2x1xf32> to vector<2x64xf32>
    %22 = arith.mulf %17, %21 : vector<2x64xf32>
    %cst_11 = arith.constant dense<0.000000e+00> : vector<2x1024xf32>
    %23 = tpu.matmul %22, %1, %cst_11 {dimension_numbers = #tpu.dot_dimension_numbers<[1], [0], [0], [1], [0, 0, 1, 1], [], []>} : vector<2x64xf32>, vector<64x1024xf32>, vector<2x1024xf32> -> vector<2x1024xf32>
    %c0_12 = arith.constant 0 : index
    %c0_13 = arith.constant 0 : index
    %c0_14 = arith.constant 0 : index
    %24 = vector.load %arg4[%c0_12, %c0_13, %c0_14] : memref<1x2x1024xf32, #tpu.memory_space<vmem>>, vector<1x2x1024xf32>
    %25 = vector.shape_cast %24 : vector<1x2x1024xf32> to vector<2x1024xf32>
    %26 = vector.shape_cast %23 : vector<2x1024xf32> to vector<1x2x1024xf32>
    tpu.vector_store %arg4[%c0_12, %c0_13, %c0_14], %26 {strides = array<i32>} : memref<1x2x1024xf32, #tpu.memory_space<vmem>>, vector<1x2x1024xf32>,
    return
  }
  func.func @transform_0(%arg0: i32) -> (i32, i32, i32) {
    %c0_i32 = arith.constant 0 : i32
    %c0_i32_0 = arith.constant 0 : i32
    %c0_i32_1 = arith.constant 0 : i32
    return %arg0, %c0_i32, %c0_i32_0 : i32, i32, i32
  }
  func.func @transform_1(%arg0: i32) -> (i32, i32) {
    %c0_i32 = arith.constant 0 : i32
    %c0_i32_0 = arith.constant 0 : i32
    %c0_i32_1 = arith.constant 0 : i32
    return %c0_i32, %c0_i32_0 : i32, i32
  }
  func.func @transform_2(%arg0: i32) -> (i32, i32) {
    %c0_i32 = arith.constant 0 : i32
    %c0_i32_0 = arith.constant 0 : i32
    %c0_i32_1 = arith.constant 0 : i32
    return %c0_i32, %c0_i32_0 : i32, i32
  }
  func.func @transform_3(%arg0: i32) -> (i32, i32, i32) {
    %c0_i32 = arith.constant 0 : i32
    %c0_i32_0 = arith.constant 0 : i32
    %c0_i32_1 = arith.constant 0 : i32
    return %arg0, %c0_i32, %c0_i32_0 : i32, i32, i32
  }
}

</mosaic_0001>

<llo_original>
// kernel: tpu_custom_call.1
$region0: #{tpu_custom_call.1}
  #allocation0 [shape = 'u32[]', space=smem, size = 0x4, offset = 0x4, fixed_abs, tag = 'smem constant byte address 0x4 - core index']
  #allocation1 [shape = 'u32[72,128]{1,0:T(1,128)}', space=vmem, size = 0x9000, scoped, tag = 'internal scratch']
  %s0 = inlined_call_operand.vmem [shape: f32[2,256,64], index: 0, kind: input, shape index: {}]
  %s1 = inlined_call_operand.vmem [shape: f32[2,256], index: 1, kind: input, shape index: {}]
  %s2 = inlined_call_operand.vmem [shape: f32[64,1024], index: 2, kind: input, shape index: {}]
  %s3 = inlined_call_operand.hbm [shape: f32[2,2,1024], index: 3, kind: output, shape index: {}]
  %s4 = sld [smem:[#allocation0]]
  $region45: #{tpu_custom_call.1} parent=0
    _
  %s6 = ssub.s32 1, %s4
  %s7 = scalar_select 0, %s6, %s4
  $region1: #{tpu_custom_call.1} parent=0
    #allocation2 [shape = 'u8[16384]{0}', space=vmem, size = 0x4000, scoped, tag = 'output window, operand 0']
    #allocation3 [shape = 's32[2]{0}', space=sflag, size = 0x8, scoped, tag = 'scoped memory for tpu_custom_call.1']
    %8 = vsyncpa [#allocation3], 0
    %s9 = scalar_lea.sflag [#allocation3], 1
    %10 = vsyncpa %s9, 0
    loop: start=0, step=1, limit=4
    $region2: #{tpu_custom_call.1} parent=1 // loop_pre_header
      _
    $region3: #{tpu_custom_call.1} parent=1 // loop_header
      %s12 = sphi 0, %s16
      %p13 = scmp.ge.s32.totalorder %s12, 4
      %s22 = sphi 0, %s24
      %s25 = sphi 0, %s22
      %s26 = sphi 0, %s25
      %s42 = sphi 0, %s26
      %s46 = sphi 0, %s46
      %s48 = sphi 0, %s46
      %s49 = sphi 0, %s48
      %s63 = sphi 0, %s49
      %s67 = sphi 0, %s67
      %s69 = sphi 0, %s67
      %s70 = sphi 0, %s69
      %s84 = sphi 0, %s70
      %s90 = sphi 0, %s92
      %s93 = sphi 0, %s90
      %s94 = sphi 0, %s93
      %s110 = sphi 0, %s94
    $region4: #{tpu_custom_call.1} parent=1 // loop_header_branch
      %15 = sbr.rel (%p13) target = $region8
    $region5: #{tpu_custom_call.1} parent=1 // loop_body
      %s17 = ssub.s32 %s12, 1
      %s18 = ssub.s32 %s12, 2
      %s19 = sadd.s32 %s12, 1
      %s20 = ssub.s32 %s12, %s19
      %p21 = scmp.eq.s32.totalorder %s20, 0
      %s23 = sadd.s32 %s22, 1
      %s24 = scalar_select %p21, %s22, %s23
      %p27 = pneg %p21
      %p28 = scmp.eq.s32.totalorder %s12, 1
      %p29 = por %p27, %p28
      %p30 = scmp.ne.s32.totalorder %s22, %s25
      %p31 = scmp.eq.s32.totalorder %s12, 0
      %p32 = por %p30, %p31
      %p33 = scmp.ne.s32.totalorder %s22, %s25
      %p34 = scmp.eq.s32.totalorder %s17, 1
      %p35 = por %p33, %p34
      %p36 = scmp.ne.s32.totalorder %s25, %s26
      %p37 = scmp.eq.s32.totalorder %s17, 0
      %p38 = por %p36, %p37
      %p39 = scmp.ne.s32.totalorder %s25, %s26
      %p40 = scmp.eq.s32.totalorder %s18, 1
      %p41 = por %p39, %p40
      %p43 = scmp.ne.s32.totalorder %s26, %s42
      %p44 = scmp.eq.s32.totalorder %s18, 0
      %p45 = por %p43, %p44
      %s47 = sadd.s32 %s46, 1
      %p50 = scmp.eq.s32.totalorder %s12, 1
      %p51 = scmp.ne.s32.totalorder %s46, %s48
      %p52 = scmp.eq.s32.totalorder %s12, 0
      %p53 = por %p51, %p52
      %p54 = scmp.ne.s32.totalorder %s46, %s48
      %p55 = scmp.eq.s32.totalorder %s17, 1
      %p56 = por %p54, %p55
      %p57 = scmp.ne.s32.totalorder %s48, %s49
      %p58 = scmp.eq.s32.totalorder %s17, 0
      %p59 = por %p57, %p58
      %p60 = scmp.ne.s32.totalorder %s48, %s49
      %p61 = scmp.eq.s32.totalorder %s18, 1
      %p62 = por %p60, %p61
      %p64 = scmp.ne.s32.totalorder %s49, %s63
      %p65 = scmp.eq.s32.totalorder %s18, 0
      %p66 = por %p64, %p65
      %s68 = sadd.s32 %s67, 1
      %p71 = scmp.eq.s32.totalorder %s12, 1
      %p72 = scmp.ne.s32.totalorder %s67, %s69
      %p73 = scmp.eq.s32.totalorder %s12, 0
      %p74 = por %p72, %p73
      %p75 = scmp.ne.s32.totalorder %s67, %s69
      %p76 = scmp.eq.s32.totalorder %s17, 1
      %p77 = por %p75, %p76
      %p78 = scmp.ne.s32.totalorder %s69, %s70
      %p79 = scmp.eq.s32.totalorder %s17, 0
      %p80 = por %p78, %p79
      %p81 = scmp.ne.s32.totalorder %s69, %s70
      %p82 = scmp.eq.s32.totalorder %s18, 1
      %p83 = por %p81, %p82
      %p85 = scmp.ne.s32.totalorder %s70, %s84
      %p86 = scmp.eq.s32.totalorder %s18, 0
      %p87 = por %p85, %p86
      %s88 = ssub.s32 %s12, %s19
      %p89 = scmp.eq.s32.totalorder %s88, 0
      %s91 = sadd.s32 %s90, 1
      %s92 = scalar_select %p89, %s90, %s91
      %p95 = pneg %p89
      %p96 = scmp.eq.s32.totalorder %s12, 1
      %p97 = por %p95, %p96
      %p98 = scmp.ne.s32.totalorder %s90, %s93
      %p99 = scmp.eq.s32.totalorder %s12, 0
      %p100 = por %p98, %p99
      %p101 = scmp.ne.s32.totalorder %s90, %s93
      %p102 = scmp.eq.s32.totalorder %s17, 1
      %p103 = por %p101, %p102
      %p104 = scmp.ne.s32.totalorder %s93, %s94
      %p105 = scmp.eq.s32.totalorder %s17, 0
      %p106 = por %p104, %p105
      %p107 = scmp.ne.s32.totalorder %s93, %s94
      %p108 = scmp.eq.s32.totalorder %s18, 1
      %p109 = por %p107, %p108
      %p111 = scmp.ne.s32.totalorder %s94, %s110
      %p112 = scmp.eq.s32.totalorder %s18, 0
      %p113 = por %p111, %p112
      %p114 = scmp.le.s32.totalorder 1, %s12
      %p115 = scmp.lt.s32.totalorder %s12, 3
      %p116 = pnand %p114, %p115
      %p117 = pneg %p116
      // Predicated region
      $region9: #{tpu_custom_call.1} parent=5 // pred_check
        _
      $region10: #{tpu_custom_call.1} parent=5 // pred_check_branch
        %119 = sbr.rel (%p116) target = $region12
      $region11: #{tpu_custom_call.1} parent=5 // pred_region
        %s120 = ssub.s32 %s12, 1
        // Predicated region
        $region13: #{tpu_custom_call.1} parent=11 // pred_check
          %p121 = pneg %p59
        $region14: #{tpu_custom_call.1} parent=11 // pred_check_branch
          %123 = sbr.rel (%p121) target = $region16
        $region15: #{tpu_custom_call.1} parent=11 // pred_region
          _
        $region16: #{tpu_custom_call.1} parent=11 // pred_fallthru
          _
        // Predicated region
        $region17: #{tpu_custom_call.1} parent=11 // pred_check
          %p124 = pneg %p80
        $region18: #{tpu_custom_call.1} parent=11 // pred_check_branch
          %126 = sbr.rel (%p124) target = $region20
        $region19: #{tpu_custom_call.1} parent=11 // pred_region
          _
        $region20: #{tpu_custom_call.1} parent=11 // pred_fallthru
          _
      $region12: #{tpu_custom_call.1} parent=5 // pred_fallthru
        _
      %p127 = scmp.lt.s32.totalorder %s12, 2
      // Predicated region
      $region21: #{tpu_custom_call.1} parent=5 // pred_check
        %p128 = pneg %p127
      $region22: #{tpu_custom_call.1} parent=5 // pred_check_branch
        %130 = sbr.rel (%p128) target = $region24
      $region23: #{tpu_custom_call.1} parent=5 // pred_region
        // Predicated region
        $region25: #{tpu_custom_call.1} parent=23 // pred_check
          %p131 = pneg %p32
        $region26: #{tpu_custom_call.1} parent=23 // pred_check_branch
          %133 = sbr.rel (%p131) target = $region28
        $region27: #{tpu_custom_call.1} parent=23 // pred_region
          %p134 = scmp.lt.s32.totalorder %s12, 1
          %s135 = scalar_select %p134, %s12, 1
          %s136 = smul.addr %s135, 32
          %s137 = smul.addr %s136, 8
          %s138 = scalar_lea.vmem %s0, %s137
        $region28: #{tpu_custom_call.1} parent=23 // pred_fallthru
          _
      $region24: #{tpu_custom_call.1} parent=5 // pred_fallthru
        _
      %p139 = scmp.le.s32.totalorder 1, %s12
      %p140 = scmp.lt.s32.totalorder %s12, 3
      %p141 = pnand %p139, %p140
      %p142 = pneg %p141
      // Predicated region
      $region29: #{tpu_custom_call.1} parent=5 // pred_check
        _
      $region30: #{tpu_custom_call.1} parent=5 // pred_check_branch
        %144 = sbr.rel (%p141) target = $region32
      $region31: #{tpu_custom_call.1} parent=5 // pred_region
        %s145 = ssub.s32 %s12, 1
        %p146 = scmp.lt.s32.totalorder %s17, 1
        %s147 = scalar_select %p146, %s17, 1
        %s148 = smul.addr %s147, 32
        %s149 = smul.addr %s148, 8
        %s150 = scalar_lea.vmem %s0, %s149
        %p151 = pneg %p38
        %p152 = pneg %p35
        %p153 = pneg %p59
        %p154 = pneg %p56
        %p155 = pneg %p80
        %p156 = pneg %p77
        %p157 = pneg %p106
        %p158 = pneg %p103
        %s159 = sand.u32 %s93, 1
        %s160 = scalar_lea.sflag [#allocation3], %s159
        %s161 = sand.u32 %s93, 1
        %s162 = smul.addr %s161, 16
        %s163 = scalar_lea.vmem [#allocation2], %s162
        %p164 = scmp.lt.s32.totalorder %s17, 1
        %s165 = scalar_select %p164, %s17, 1
        %s166 = smul.addr %s165, 32
        %s167 = smul.addr %s166, 8
        %s168 = scalar_lea.vmem %s0, %s167
        %v169 = vld [vmem:[%s1] sm:$0xf]
        %v170 = vld [vmem:[%s2] sm:$0xff]
        %v171 = vld [vmem:[%s2 + $0x8] sm:$0xff]
        %v172 = vld [vmem:[%s2 + $0x10] sm:$0xff]
        %v173 = vld [vmem:[%s2 + $0x18] sm:$0xff]
        %v174 = vld [vmem:[%s2 + $0x20] sm:$0xff]
        %v175 = vld [vmem:[%s2 + $0x28] sm:$0xff]
        %v176 = vld [vmem:[%s2 + $0x30] sm:$0xff]
        %v177 = vld [vmem:[%s2 + $0x38] sm:$0xff]
        %v178 = vld [vmem:[%s2 + $0x40] sm:$0xff]
        %v179 = vld [vmem:[%s2 + $0x48] sm:$0xff]
        %v180 = vld [vmem:[%s2 + $0x50] sm:$0xff]
        %v181 = vld [vmem:[%s2 + $0x58] sm:$0xff]
        %v182 = vld [vmem:[%s2 + $0x60] sm:$0xff]
        %v183 = vld [vmem:[%s2 + $0x68] sm:$0xff]
        %v184 = vld [vmem:[%s2 + $0x70] sm:$0xff]
        %v185 = vld [vmem:[%s2 + $0x78] sm:$0xff]
        %v186 = vld [vmem:[%s2 + $0x80] sm:$0xff]
        %v187 = vld [vmem:[%s2 + $0x88] sm:$0xff]
        %v188 = vld [vmem:[%s2 + $0x90] sm:$0xff]
        %v189 = vld [vmem:[%s2 + $0x98] sm:$0xff]
        %v190 = vld [vmem:[%s2 + $0xa0] sm:$0xff]
        %v191 = vld [vmem:[%s2 + $0xa8] sm:$0xff]
        %v192 = vld [vmem:[%s2 + $0xb0] sm:$0xff]
        %v193 = vld [vmem:[%s2 + $0xb8] sm:$0xff]
        %v194 = vld [vmem:[%s2 + $0xc0] sm:$0xff]
        %v195 = vld [vmem:[%s2 + $0xc8] sm:$0xff]
        %v196 = vld [vmem:[%s2 + $0xd0] sm:$0xff]
        %v197 = vld [vmem:[%s2 + $0xd8] sm:$0xff]
        %v198 = vld [vmem:[%s2 + $0xe0] sm:$0xff]
        %v199 = vld [vmem:[%s2 + $0xe8] sm:$0xff]
        %v200 = vld [vmem:[%s2 + $0xf0] sm:$0xff]
        %v201 = vld [vmem:[%s2 + $0xf8] sm:$0xff]
        %v202 = vld [vmem:[%s2 + $0x100] sm:$0xff]
        %v203 = vld [vmem:[%s2 + $0x108] sm:$0xff]
        %v204 = vld [vmem:[%s2 + $0x110] sm:$0xff]
        %v205 = vld [vmem:[%s2 + $0x118] sm:$0xff]
        %v206 = vld [vmem:[%s2 + $0x120] sm:$0xff]
        %v207 = vld [vmem:[%s2 + $0x128] sm:$0xff]
        %v208 = vld [vmem:[%s2 + $0x130] sm:$0xff]
        %v209 = vld [vmem:[%s2 + $0x138] sm:$0xff]
        %v210 = vld [vmem:[%s2 + $0x140] sm:$0xff]
        %v211 = vld [vmem:[%s2 + $0x148] sm:$0xff]
        %v212 = vld [vmem:[%s2 + $0x150] sm:$0xff]
        %v213 = vld [vmem:[%s2 + $0x158] sm:$0xff]
        %v214 = vld [vmem:[%s2 + $0x160] sm:$0xff]
        %v215 = vld [vmem:[%s2 + $0x168] sm:$0xff]
        %v216 = vld [vmem:[%s2 + $0x170] sm:$0xff]
        %v217 = vld [vmem:[%s2 + $0x178] sm:$0xff]
        %v218 = vld [vmem:[%s2 + $0x180] sm:$0xff]
        %v219 = vld [vmem:[%s2 + $0x188] sm:$0xff]
        %v220 = vld [vmem:[%s2 + $0x190] sm:$0xff]
        %v221 = vld [vmem:[%s2 + $0x198] sm:$0xff]
        %v222 = vld [vmem:[%s2 + $0x1a0] sm:$0xff]
        %v223 = vld [vmem:[%s2 + $0x1a8] sm:$0xff]
        %v224 = vld [vmem:[%s2 + $0x1b0] sm:$0xff]
        %v225 = vld [vmem:[%s2 + $0x1b8] sm:$0xff]
        %v226 = vld [vmem:[%s2 + $0x1c0] sm:$0xff]
        %v227 = vld [vmem:[%s2 + $0x1c8] sm:$0xff]
        %v228 = vld [vmem:[%s2 + $0x1d0] sm:$0xff]
        %v229 = vld [vmem:[%s2 + $0x1d8] sm:$0xff]
        %v230 = vld [vmem:[%s2 + $0x1e0] sm:$0xff]
        %v231 = vld [vmem:[%s2 + $0x1e8] sm:$0xff]
        %v232 = vld [vmem:[%s2 + $0x1f0] sm:$0xff]
        %v233 = vld [vmem:[%s2 + $0x1f8] sm:$0xff]
        %v234 = vld [vmem:[%s168] sm:$0xff]
        %v235 = vld [vmem:[%s168 + $0x8] sm:$0xff]
        %v236 = vld [vmem:[%s168 + $0x10] sm:$0xff]
        %v237 = vld [vmem:[%s168 + $0x18] sm:$0xff]
        %v238 = vld [vmem:[%s168 + $0x20] sm:$0xff]
        %v239 = vld [vmem:[%s168 + $0x28] sm:$0xff]
        %v240 = vld [vmem:[%s168 + $0x30] sm:$0xff]
        %v241 = vld [vmem:[%s168 + $0x38] sm:$0xff]
        %v242 = vld [vmem:[%s168 + $0x40] sm:$0xff]
        %v243 = vld [vmem:[%s168 + $0x48] sm:$0xff]
        %v244 = vld [vmem:[%s168 + $0x50] sm:$0xff]
        %v245 = vld [vmem:[%s168 + $0x58] sm:$0xff]
        %v246 = vld [vmem:[%s168 + $0x60] sm:$0xff]
        %v247 = vld [vmem:[%s168 + $0x68] sm:$0xff]
        %v248 = vld [vmem:[%s168 + $0x70] sm:$0xff]
        %v249 = vld [vmem:[%s168 + $0x78] sm:$0xff]
        %v250 = vld [vmem:[%s168 + $0x80] sm:$0xff]
        %v251 = vld [vmem:[%s168 + $0x88] sm:$0xff]
        %v252 = vld [vmem:[%s168 + $0x90] sm:$0xff]
        %v253 = vld [vmem:[%s168 + $0x98] sm:$0xff]
        %v254 = vld [vmem:[%s168 + $0xa0] sm:$0xff]
        %v255 = vld [vmem:[%s168 + $0xa8] sm:$0xff]
        %v256 = vld [vmem:[%s168 + $0xb0] sm:$0xff]
        %v257 = vld [vmem:[%s168 + $0xb8] sm:$0xff]
        %v258 = vld [vmem:[%s168 + $0xc0] sm:$0xff]
        %v259 = vld [vmem:[%s168 + $0xc8] sm:$0xff]
        %v260 = vld [vmem:[%s168 + $0xd0] sm:$0xff]
        %v261 = vld [vmem:[%s168 + $0xd8] sm:$0xff]
        %v262 = vld [vmem:[%s168 + $0xe0] sm:$0xff]
        %v263 = vld [vmem:[%s168 + $0xe8] sm:$0xff]
        %v264 = vld [vmem:[%s168 + $0xf0] sm:$0xff]
        %v265 = vld [vmem:[%s168 + $0xf8] sm:$0xff]
        %267 = vst [vmem:[#allocation1] ss:$4 sm:$0xff] %v169
        %v268 = vld.sshfl [vmem:[#allocation1] sm:$0xff pattern:$0x73625140]
        %v269 = vld.sshfl [vmem:[#allocation1 + $0x8] sm:$0xff pattern:$0x73625140]
        %272 = vmatpush.msra.mxu0 %v249
        %273 = vmatpush.msra.mxu0 %v248
        %274 = vmatpush.msra.mxu0 %v247
        %275 = vmatpush.msra.mxu0 %v246
        %276 = vmatpush.msra.mxu0 %v245
        %277 = vmatpush.msra.mxu0 %v244
        %278 = vmatpush.msra.mxu0 %v243
        %279 = vmatpush.msra.mxu0 %v242
        %280 = vmatpush.msra.mxu0 %v241
        %281 = vmatpush.msra.mxu0 %v240
        %282 = vmatpush.msra.mxu0 %v239
        %283 = vmatpush.msra.mxu0 %v238
        %284 = vmatpush.msra.mxu0 %v237
        %285 = vmatpush.msra.mxu0 %v236
        %286 = vmatpush.msra.mxu0 %v235
        %287 = vmatpush.msra.mxu0 %v234
        %288 = vmatmul.f32.gmra.mxu0 %v268
        %v289 = vpop.f32.mrf.mxu0
        %v290 = vadd.f32 0.0, %v289
        %291 = vdwg.mxu0
        %292 = vmatpush.msra.mxu0 %v265
        %293 = vmatpush.msra.mxu0 %v264
        %294 = vmatpush.msra.mxu0 %v263
        %295 = vmatpush.msra.mxu0 %v262
        %296 = vmatpush.msra.mxu0 %v261
        %297 = vmatpush.msra.mxu0 %v260
        %298 = vmatpush.msra.mxu0 %v259
        %299 = vmatpush.msra.mxu0 %v258
        %300 = vmatpush.msra.mxu0 %v257
        %301 = vmatpush.msra.mxu0 %v256
        %302 = vmatpush.msra.mxu0 %v255
        %303 = vmatpush.msra.mxu0 %v254
        %304 = vmatpush.msra.mxu0 %v253
        %305 = vmatpush.msra.mxu0 %v252
        %306 = vmatpush.msra.mxu0 %v251
        %307 = vmatpush.msra.mxu0 %v250
        %308 = vmatmul.f32.gmra.mxu0 %v269
        %v309 = vpop.f32.mrf.mxu0
        %v310 = vadd.f32 %v290, %v309
        %311 = vdwg.mxu0
        %vm312 = vcmask 517120
        %v313 = vsel %vm312, %v310, 0.0
        %314 = vadd.xlane.f32.xlu0 %v313
        %v315 = vpop.xlane.xlu0 %314
        %v316 = vrcp.pop 64.0
        %v317 = vmul.f32 64.0, %v316
        %v318 = vsub.f32 1.0, %v317
        %v319 = vmul.f32 %v316, %v318
        %v320 = vadd.f32 %v316, %v319
        %vm321 = vweird.f32 %v316
        %v322 = vsel %vm321, %v316, %v320
        %v323 = vmul.f32 %v315, %v322
        %v324 = vsub.f32 %v310, %v323
        %v325 = vmul.f32 %v324, %v324
        %v326 = vsel %vm312, %v325, 0.0
        %327 = vadd.xlane.f32.xlu0 %v326
        %v328 = vpop.xlane.xlu0 %327
        %v329 = vmul.f32 %v328, %v322
        %v330 = vadd.f32 %v329, 1e-05
        %v331 = vrsqrt.pop %v330
        %v332 = vmul.f32 %v331, %v330
        %v333 = vmul.f32 %v332, %v331
        %v334 = vmul.f32 0.5, %v333
        %v335 = vsub.f32 1.5, %v334
        %v336 = vmul.f32 %v331, %v335
        %vm337 = vweird.f32 %v330
        %vm338 = vweird.f32 %v331
        %vm339 = vmor %vm337, %vm338
        %v340 = vsel %vm339, %v331, %v336
        %v341 = vmul.f32 %v324, %v340
        %vm342 = vcmask 523264
        %v344 = vsel %vm342, %v341, 0
        %346 = vmatpush.msra.mxu0 0.0
        %347 = vmatpush.msra.mxu0 0.0
        %348 = vmatpush.msra.mxu0 0.0
        %349 = vmatpush.msra.mxu0 0.0
        %350 = vmatpush.msra.mxu0 0.0
        %351 = vmatpush.msra.mxu0 0.0
        %352 = vmatpush.msra.mxu0 0.0
        %353 = vmatpush.msra.mxu0 0.0
        %354 = vmatpush.msra.mxu0 %v226
        %355 = vmatpush.msra.mxu0 %v218
        %356 = vmatpush.msra.mxu0 %v210
        %357 = vmatpush.msra.mxu0 %v202
        %358 = vmatpush.msra.mxu0 %v194
        %359 = vmatpush.msra.mxu0 %v186
        %360 = vmatpush.msra.mxu0 %v178
        %361 = vmatpush.msra.mxu0 %v170
        %362 = vmatmul.f32.gmra.mxu0 %v344
        %v363 = vpop.f32.mrf.mxu0
        %v364 = vadd.f32 0.0, %v363
        %365 = vdwg.mxu0
        %366 = vmatpush.msra.mxu0 0.0
        %367 = vmatpush.msra.mxu0 0.0
        %368 = vmatpush.msra.mxu0 0.0
        %369 = vmatpush.msra.mxu0 0.0
        %370 = vmatpush.msra.mxu0 0.0
        %371 = vmatpush.msra.mxu0 0.0
        %372 = vmatpush.msra.mxu0 0.0
        %373 = vmatpush.msra.mxu0 0.0
        %374 = vmatpush.msra.mxu0 %v227
        %375 = vmatpush.msra.mxu0 %v219
        %376 = vmatpush.msra.mxu0 %v211
        %377 = vmatpush.msra.mxu0 %v203
        %378 = vmatpush.msra.mxu0 %v195
        %379 = vmatpush.msra.mxu0 %v187
        %380 = vmatpush.msra.mxu0 %v179
        %381 = vmatpush.msra.mxu0 %v171
        %382 = vmatmul.f32.gmra.mxu0 %v344
        %v383 = vpop.f32.mrf.mxu0
        %v384 = vadd.f32 0.0, %v383
        %385 = vdwg.mxu0
        %386 = vmatpush.msra.mxu0 0.0
        %387 = vmatpush.msra.mxu0 0.0
        %388 = vmatpush.msra.mxu0 0.0
        %389 = vmatpush.msra.mxu0 0.0
        %390 = vmatpush.msra.mxu0 0.0
        %391 = vmatpush.msra.mxu0 0.0
        %392 = vmatpush.msra.mxu0 0.0
        %393 = vmatpush.msra.mxu0 0.0
        %394 = vmatpush.msra.mxu0 %v228
        %395 = vmatpush.msra.mxu0 %v220
        %396 = vmatpush.msra.mxu0 %v212
        %397 = vmatpush.msra.mxu0 %v204
        %398 = vmatpush.msra.mxu0 %v196
        %399 = vmatpush.msra.mxu0 %v188
        %400 = vmatpush.msra.mxu0 %v180
        %401 = vmatpush.msra.mxu0 %v172
        %402 = vmatmul.f32.gmra.mxu0 %v344
        %v403 = vpop.f32.mrf.mxu0
        %v404 = vadd.f32 0.0, %v403
        %405 = vdwg.mxu0
        %406 = vmatpush.msra.mxu0 0.0
        %407 = vmatpush.msra.mxu0 0.0
        %408 = vmatpush.msra.mxu0 0.0
        %409 = vmatpush.msra.mxu0 0.0
        %410 = vmatpush.msra.mxu0 0.0
        %411 = vmatpush.msra.mxu0 0.0
        %412 = vmatpush.msra.mxu0 0.0
        %413 = vmatpush.msra.mxu0 0.0
        %414 = vmatpush.msra.mxu0 %v229
        %415 = vmatpush.msra.mxu0 %v221
        %416 = vmatpush.msra.mxu0 %v213
        %417 = vmatpush.msra.mxu0 %v205
        %418 = vmatpush.msra.mxu0 %v197
        %419 = vmatpush.msra.mxu0 %v189
        %420 = vmatpush.msra.mxu0 %v181
        %421 = vmatpush.msra.mxu0 %v173
        %422 = vmatmul.f32.gmra.mxu0 %v344
        %v423 = vpop.f32.mrf.mxu0
        %v424 = vadd.f32 0.0, %v423
        %425 = vdwg.mxu0
        %426 = vmatpush.msra.mxu0 0.0
        %427 = vmatpush.msra.mxu0 0.0
        %428 = vmatpush.msra.mxu0 0.0
        %429 = vmatpush.msra.mxu0 0.0
        %430 = vmatpush.msra.mxu0 0.0
        %431 = vmatpush.msra.mxu0 0.0
        %432 = vmatpush.msra.mxu0 0.0
        %433 = vmatpush.msra.mxu0 0.0
        %434 = vmatpush.msra.mxu0 %v230
        %435 = vmatpush.msra.mxu0 %v222
        %436 = vmatpush.msra.mxu0 %v214
        %437 = vmatpush.msra.mxu0 %v206
        %438 = vmatpush.msra.mxu0 %v198
        %439 = vmatpush.msra.mxu0 %v190
        %440 = vmatpush.msra.mxu0 %v182
        %441 = vmatpush.msra.mxu0 %v174
        %442 = vmatmul.f32.gmra.mxu0 %v344
        %v443 = vpop.f32.mrf.mxu0
        %v444 = vadd.f32 0.0, %v443
        %445 = vdwg.mxu0
        %446 = vmatpush.msra.mxu0 0.0
        %447 = vmatpush.msra.mxu0 0.0
        %448 = vmatpush.msra.mxu0 0.0
        %449 = vmatpush.msra.mxu0 0.0
        %450 = vmatpush.msra.mxu0 0.0
        %451 = vmatpush.msra.mxu0 0.0
        %452 = vmatpush.msra.mxu0 0.0
        %453 = vmatpush.msra.mxu0 0.0
        %454 = vmatpush.msra.mxu0 %v231
        %455 = vmatpush.msra.mxu0 %v223
        %456 = vmatpush.msra.mxu0 %v215
        %457 = vmatpush.msra.mxu0 %v207
        %458 = vmatpush.msra.mxu0 %v199
        %459 = vmatpush.msra.mxu0 %v191
        %460 = vmatpush.msra.mxu0 %v183
        %461 = vmatpush.msra.mxu0 %v175
        %462 = vmatmul.f32.gmra.mxu0 %v344
        %v463 = vpop.f32.mrf.mxu0
        %v464 = vadd.f32 0.0, %v463
        %465 = vdwg.mxu0
        %466 = vmatpush.msra.mxu0 0.0
        %467 = vmatpush.msra.mxu0 0.0
        %468 = vmatpush.msra.mxu0 0.0
        %469 = vmatpush.msra.mxu0 0.0
        %470 = vmatpush.msra.mxu0 0.0
        %471 = vmatpush.msra.mxu0 0.0
        %472 = vmatpush.msra.mxu0 0.0
        %473 = vmatpush.msra.mxu0 0.0
        %474 = vmatpush.msra.mxu0 %v232
        %475 = vmatpush.msra.mxu0 %v224
        %476 = vmatpush.msra.mxu0 %v216
        %477 = vmatpush.msra.mxu0 %v208
        %478 = vmatpush.msra.mxu0 %v200
        %479 = vmatpush.msra.mxu0 %v192
        %480 = vmatpush.msra.mxu0 %v184
        %481 = vmatpush.msra.mxu0 %v176
        %482 = vmatmul.f32.gmra.mxu0 %v344
        %v483 = vpop.f32.mrf.mxu0
        %v484 = vadd.f32 0.0, %v483
        %485 = vdwg.mxu0
        %486 = vmatpush.msra.mxu0 0.0
        %487 = vmatpush.msra.mxu0 0.0
        %488 = vmatpush.msra.mxu0 0.0
        %489 = vmatpush.msra.mxu0 0.0
        %490 = vmatpush.msra.mxu0 0.0
        %491 = vmatpush.msra.mxu0 0.0
        %492 = vmatpush.msra.mxu0 0.0
        %493 = vmatpush.msra.mxu0 0.0
        %494 = vmatpush.msra.mxu0 %v233
        %495 = vmatpush.msra.mxu0 %v225
        %496 = vmatpush.msra.mxu0 %v217
        %497 = vmatpush.msra.mxu0 %v209
        %498 = vmatpush.msra.mxu0 %v201
        %499 = vmatpush.msra.mxu0 %v193
        %500 = vmatpush.msra.mxu0 %v185
        %501 = vmatpush.msra.mxu0 %v177
        %502 = vmatmul.f32.gmra.mxu0 %v344
        %v503 = vpop.f32.mrf.mxu0
        %v504 = vadd.f32 0.0, %v503
        %505 = vdwg.mxu0
        %v514 = vrot.slane %v384, 6
        %v515 = vrot.slane %v404, 4
        %v516 = vrot.slane %v424, 2
        %v517 = vrot.slane %v464, 6
        %v518 = vrot.slane %v484, 4
        %v519 = vrot.slane %v504, 2
        %vm520 = vcmask 1041408
        %v521 = vsel %vm520, %v364, %v514
        %vm522 = vcmask 1045508
        %v523 = vsel %vm522, %v515, %v516
        %vm524 = vcmask 1043456
        %v525 = vsel %vm524, %v521, %v523
        %v526 = vsel %vm520, %v444, %v517
        %v527 = vsel %vm522, %v518, %v519
        %v528 = vsel %vm524, %v526, %v527
        %531 = vst [vmem:[%s163] sm:$0xff] %v525
        %532 = vst [vmem:[%s163 + $0x8] sm:$0xff] %v528
        %s533 = sand.u32 %s93, 1
        %s534 = scalar_lea.sflag [#allocation3], %s533
        %s535 = sand.u32 %s93, 1
        %s536 = smul.addr %s535, 16
        %s537 = scalar_lea.vmem [#allocation2], %s536
        // Predicated region
        $region33: #{tpu_custom_call.1} parent=31 // pred_check
          %p538 = pneg %p103
        $region34: #{tpu_custom_call.1} parent=31 // pred_check_branch
          %540 = sbr.rel (%p538) target = $region36
        $region35: #{tpu_custom_call.1} parent=31 // pred_region
          %542 = vsyncadd %s534, 0
          %s543 = smul.addr %s17, 8
          %s544 = smul.addr %s543, 2
          %s545 = scalar_lea.hbm %s3, %s544
          %s547 = sshll.u32 %s537, 4
          %s548 = int_to_ptr.vmem [resolvable:$true] %s547
          %s549 = sshll.u32 %s545, 4
          %s550 = int_to_ptr.hbm [resolvable:$true] %s549
          %552 = dma.vmem_to_hbm [thread:$0]  %s548, 256, %s550, %s534
        $region36: #{tpu_custom_call.1} parent=31 // pred_fallthru
          _
      $region32: #{tpu_custom_call.1} parent=5 // pred_fallthru
        _
      %p553 = scmp.le.s32.totalorder 2, %s12
      // Predicated region
      $region37: #{tpu_custom_call.1} parent=5 // pred_check
        %p554 = pneg %p553
      $region38: #{tpu_custom_call.1} parent=5 // pred_check_branch
        %556 = sbr.rel (%p554) target = $region40
      $region39: #{tpu_custom_call.1} parent=5 // pred_region
        %s557 = ssub.s32 %s12, 2
        // Predicated region
        $region41: #{tpu_custom_call.1} parent=39 // pred_check
          %p558 = pneg %p109
        $region42: #{tpu_custom_call.1} parent=39 // pred_check_branch
          %560 = sbr.rel (%p558) target = $region44
        $region43: #{tpu_custom_call.1} parent=39 // pred_region
          %s561 = sand.u32 %s94, 1
          %s562 = scalar_lea.sflag [#allocation3], %s561
          %s563 = sand.u32 %s94, 1
          %s564 = smul.addr %s563, 16
          %s565 = scalar_lea.vmem [#allocation2], %s564
          %567 = dma.done %s562, 256
        $region44: #{tpu_custom_call.1} parent=39 // pred_fallthru
          _
      $region40: #{tpu_custom_call.1} parent=5 // pred_fallthru
        _
    $region6: #{tpu_custom_call.1} parent=1 // loop_footer
      %s16 = sadd.s32 1, %s12
    $region7: #{tpu_custom_call.1} parent=1 // loop_footer_branch
      %11 = sbr.rel target = $region3
    $region8: #{tpu_custom_call.1} parent=1 // loop_exit
      _
    %568 = vsyncpa [#allocation3], 1
    %s569 = scalar_lea.sflag [#allocation3], 1
    %570 = vsyncpa %s569, 1

</llo_original>
